<compile_context>
chip_gen: v7x
topology: tpu7x:2x2x1
jax: 0.10.0
libtpu: 0.0.40
codegen_flags: <defaults>
</compile_context>

<pallas_src>
import functools

import jax
import jax.numpy as jnp
from jax import lax
from jax.experimental import pallas as pl
from jax.experimental.pallas import tpu as pltpu

# Layer sizes from the PyTorch module.
D_IN, D_H1, D_H2, D_OUT = 8, 6, 4, 1
LANES = 128
CS = 16                    # sublane chunk per inner-loop step: (16,128) f32 = 2 vregs/plane

# Flat SMEM parameter layout (f32 scalars, read with static offsets in-kernel).
W1_OFF = 0
B1_OFF = W1_OFF + D_H1 * D_IN        # 48
W2_OFF = B1_OFF + D_H1               # 54
B2_OFF = W2_OFF + D_H2 * D_H1        # 78
W3_OFF = B2_OFF + D_H2               # 82
B3_OFF = W3_OFF + D_OUT * D_H2       # 86
N_PARAMS = B3_OFF + D_OUT            # 87


def _sigmoid(z):
    # exp goes to the EUP; the divide stays exact f32 so we match the f32
    # reference at atol=1e-5 (pl.reciprocal(approx=True) would be ~1e-4 off).
    return 1.0 / (1.0 + jnp.exp(-z))


def _mac(w_row, bias, planes):
    """bias + sum_k w_row[k] * planes[k]; scalar weights, dense (CS,128) planes."""
    z = planes[0] * w_row[0]
    for k in range(1, len(planes)):
        z = z + planes[k] * w_row[k]
    return z + bias


def mlp_kernel(params_ref, x_ref, o_ref):
    # Hoist all 87 weight/bias scalar reads out of the chunk loop (SMEM, loop-invariant).
    w1 = [[params_ref[W1_OFF + o * D_IN + k] for k in range(D_IN)] for o in range(D_H1)]
    b1 = [params_ref[B1_OFF + o] for o in range(D_H1)]
    w2 = [[params_ref[W2_OFF + o * D_H1 + k] for k in range(D_H1)] for o in range(D_H2)]
    b2 = [params_ref[B2_OFF + o] for o in range(D_H2)]
    w3 = [params_ref[W3_OFF + k] for k in range(D_H2)]
    b3 = params_ref[B3_OFF]

    n_chunks = x_ref.shape[1] // CS      # static: block sublane-rows / chunk

    def body(j, carry):
        s = pl.multiple_of(j * CS, CS)
        # 8 batch-dense (CS, 128) feature planes: full sublane + lane utilization,
        # no sublane/lane broadcasts anywhere in the layer stack.
        x = [x_ref[k, pl.ds(s, CS), :] for k in range(D_IN)]
        h1 = [_sigmoid(_mac(w1[o], b1[o], x)) for o in range(D_H1)]     # 6 planes
        h2 = [_sigmoid(_mac(w2[o], b2[o], h1)) for o in range(D_H2)]    # 4 planes
        y = _sigmoid(_mac(w3, b3, h2))                                  # 1 plane
        o_ref[pl.ds(s, CS), :] = y       # lane-dense, unmasked store
        return carry

    lax.fori_loop(0, n_chunks, body, 0)


def _round_up(x, m):
    return ((x + m - 1) // m) * m


def _pack_params(w1, b1, w2, b2, w3, b3):
    return jnp.concatenate([
        w1.reshape(-1), b1.reshape(-1),
        w2.reshape(-1), b2.reshape(-1),
        w3.reshape(-1), b3.reshape(-1),
    ]).astype(jnp.float32)


@functools.partial(jax.jit, static_argnames=("tbs_max",))
def mlp_forward(x, w1, b1, w2, b2, w3, b3, *, tbs_max=512):
    """x: (B, 8) f32; weights in PyTorch layout W:(out,in), b:(out,). Returns (B, 1)."""
    batch = x.shape[0]

    # Batch tiling: each sublane-row holds 128 samples on the lane axis.
    s_rows = _round_up(max(batch, 1), LANES) // LANES
    if s_rows > CS:
        # Aim for >= 2 grid steps so v7x's two TensorCores both get work,
        # while capping the block at tbs_max rows (~2 MiB at 512) to amortize
        # the ~0.35 us per-grid-step overhead without stressing VMEM.
        tbs = min(tbs_max, _round_up((s_rows + 1) // 2, CS))
    else:
        tbs = CS
    s_pad = _round_up(s_rows, tbs)
    bp = s_pad * LANES
    grid = (s_pad // tbs,)

    # Feature-major, batch-dense layout: element (k, s, l) = x[s*128 + l, k].
    # This transpose is one extra XLA pass over the (small, D_IN=8-wide) input.
    # TODO(synk): accept a feature-major (8, B) activation upstream to skip it.
    x_p = jnp.pad(x.astype(jnp.float32), ((0, bp - batch), (0, 0)))
    x_t = x_p.T.reshape(D_IN, s_pad, LANES)

    params = _pack_params(w1, b1, w2, b2, w3, b3)

    flops = 2 * bp * (D_IN * D_H1 + D_H1 * D_H2 + D_H2 * D_OUT)
    transcendentals = bp * (D_H1 + D_H2 + D_OUT)
    bytes_accessed = 4 * bp * (D_IN + D_OUT) + 4 * N_PARAMS

    out = pl.pallas_call(
        mlp_kernel,
        out_shape=jax.ShapeDtypeStruct((s_pad, LANES), jnp.float32),
        grid_spec=pltpu.PrefetchScalarGridSpec(
            num_scalar_prefetch=1,                               # params -> SMEM scalars
            grid=grid,
            in_specs=[pl.BlockSpec((D_IN, tbs, LANES), lambda i, p: (0, i, 0))],
            out_specs=pl.BlockSpec((tbs, LANES), lambda i, p: (i, 0)),
        ),
        compiler_params=pltpu.CompilerParams(
            dimension_semantics=("parallel",),                   # split batch across TCs
        ),
        cost_estimate=pl.CostEstimate(
            flops=flops,
            transcendentals=transcendentals,
            bytes_accessed=bytes_accessed,
        ),
    )(params, x_t)

    return out.reshape(-1)[:batch].reshape(batch, 1)


def init_linear(key, fan_in, fan_out):
    """PyTorch nn.Linear default init: uniform +-1/sqrt(fan_in); W stored as (out, in)."""
    kw, kb = jax.random.split(key)
    bound = 1.0 / jnp.sqrt(jnp.float32(fan_in))
    w = jax.random.uniform(kw, (fan_out, fan_in), jnp.float32, -bound, bound)
    b = jax.random.uniform(kb, (fan_out,), jnp.float32, -bound, bound)
    return w, b


def reference(x, w1, b1, w2, b2, w3, b3):
    h1 = _sigmoid(x @ w1.T + b1)
    h2 = _sigmoid(h1 @ w2.T + b2)
    return _sigmoid(h2 @ w3.T + b3)


if __name__ == "__main__":
    key = jax.random.PRNGKey(0)
    kx, k1, k2, k3, kx2 = jax.random.split(key, 5)

    w1, b1 = init_linear(k1, D_IN, D_H1)
    w2, b2 = init_linear(k2, D_H1, D_H2)
    w3, b3 = init_linear(k3, D_H2, D_OUT)

    # Small shape consistent with the module (batch=8, features=8).
    B = 8
    x = jax.random.normal(kx, (B, D_IN), jnp.float32)
    y = mlp_forward(x, w1, b1, w2, b2, w3, b3)
    jax.block_until_ready(y)
    ref = reference(x, w1, b1, w2, b2, w3, b3)
    assert y.shape == (B, D_OUT), y.shape
    assert jnp.allclose(y, ref, atol=1e-5), "mismatch vs reference (small batch)"

    # Larger batch: exercises multiple grid steps and the inner chunk loop.
    B2 = 8192
    x2 = jax.random.normal(kx2, (B2, D_IN), jnp.float32)
    y2 = mlp_forward(x2, w1, b1, w2, b2, w3, b3)
    jax.block_until_ready(y2)
    ref2 = reference(x2, w1, b1, w2, b2, w3, b3)
    assert y2.shape == (B2, D_OUT), y2.shape
    assert jnp.allclose(y2, ref2, atol=1e-5), "mismatch vs reference (large batch)"

    print("KERNEL_OK")
</pallas_src>

<mosaic_0001>
module attributes {stable_mosaic.version = 11 : i64} {
  func.func @mlp_kernel(%arg0: i32, %arg1: memref<87xf32, #tpu.memory_space<smem>>, %arg2: memref<8x16x128xf32, #tpu.memory_space<vmem>>, %arg3: memref<16x128xf32, #tpu.memory_space<vmem>>) attributes {dimension_semantics = [#tpu.dimension_semantics<parallel>], iteration_bounds = array<i64: 1>, scalar_prefetch = 1 : i64, scratch_operands = 0 : i64, tpu.core_type = #tpu.core_type<tc>, window_params = [{transform_indices = @transform_0, window_bounds = array<i64: 8, 16, 128>}, {transform_indices = @transform_1, window_bounds = array<i64: 16, 128>}]} {
    %c0 = arith.constant 0 : index
    %0 = memref.load %arg1[%c0] : memref<87xf32, #tpu.memory_space<smem>>
    %c1 = arith.constant 1 : index
    %1 = memref.load %arg1[%c1] : memref<87xf32, #tpu.memory_space<smem>>
    %c2 = arith.constant 2 : index
    %2 = memref.load %arg1[%c2] : memref<87xf32, #tpu.memory_space<smem>>
    %c3 = arith.constant 3 : index
    %3 = memref.load %arg1[%c3] : memref<87xf32, #tpu.memory_space<smem>>
    %c4 = arith.constant 4 : index
    %4 = memref.load %arg1[%c4] : memref<87xf32, #tpu.memory_space<smem>>
    %c5 = arith.constant 5 : index
    %5 = memref.load %arg1[%c5] : memref<87xf32, #tpu.memory_space<smem>>
    %c6 = arith.constant 6 : index
    %6 = memref.load %arg1[%c6] : memref<87xf32, #tpu.memory_space<smem>>
    %c7 = arith.constant 7 : index
    %7 = memref.load %arg1[%c7] : memref<87xf32, #tpu.memory_space<smem>>
    %c8 = arith.constant 8 : index
    %8 = memref.load %arg1[%c8] : memref<87xf32, #tpu.memory_space<smem>>
    %c9 = arith.constant 9 : index
    %9 = memref.load %arg1[%c9] : memref<87xf32, #tpu.memory_space<smem>>
    %c10 = arith.constant 10 : index
    %10 = memref.load %arg1[%c10] : memref<87xf32, #tpu.memory_space<smem>>
    %c11 = arith.constant 11 : index
    %11 = memref.load %arg1[%c11] : memref<87xf32, #tpu.memory_space<smem>>
    %c12 = arith.constant 12 : index
    %12 = memref.load %arg1[%c12] : memref<87xf32, #tpu.memory_space<smem>>
    %c13 = arith.constant 13 : index
    %13 = memref.load %arg1[%c13] : memref<87xf32, #tpu.memory_space<smem>>
    %c14 = arith.constant 14 : index
    %14 = memref.load %arg1[%c14] : memref<87xf32, #tpu.memory_space<smem>>
    %c15 = arith.constant 15 : index
    %15 = memref.load %arg1[%c15] : memref<87xf32, #tpu.memory_space<smem>>
    %c16 = arith.constant 16 : index
    %16 = memref.load %arg1[%c16] : memref<87xf32, #tpu.memory_space<smem>>
    %c17 = arith.constant 17 : index
    %17 = memref.load %arg1[%c17] : memref<87xf32, #tpu.memory_space<smem>>
    %c18 = arith.constant 18 : index
    %18 = memref.load %arg1[%c18] : memref<87xf32, #tpu.memory_space<smem>>
    %c19 = arith.constant 19 : index
    %19 = memref.load %arg1[%c19] : memref<87xf32, #tpu.memory_space<smem>>
    %c20 = arith.constant 20 : index
    %20 = memref.load %arg1[%c20] : memref<87xf32, #tpu.memory_space<smem>>
    %c21 = arith.constant 21 : index
    %21 = memref.load %arg1[%c21] : memref<87xf32, #tpu.memory_space<smem>>
    %c22 = arith.constant 22 : index
    %22 = memref.load %arg1[%c22] : memref<87xf32, #tpu.memory_space<smem>>
    %c23 = arith.constant 23 : index
    %23 = memref.load %arg1[%c23] : memref<87xf32, #tpu.memory_space<smem>>
    %c24 = arith.constant 24 : index
    %24 = memref.load %arg1[%c24] : memref<87xf32, #tpu.memory_space<smem>>
    %c25 = arith.constant 25 : index
    %25 = memref.load %arg1[%c25] : memref<87xf32, #tpu.memory_space<smem>>
    %c26 = arith.constant 26 : index
    %26 = memref.load %arg1[%c26] : memref<87xf32, #tpu.memory_space<smem>>
    %c27 = arith.constant 27 : index
    %27 = memref.load %arg1[%c27] : memref<87xf32, #tpu.memory_space<smem>>
    %c28 = arith.constant 28 : index
    %28 = memref.load %arg1[%c28] : memref<87xf32, #tpu.memory_space<smem>>
    %c29 = arith.constant 29 : index
    %29 = memref.load %arg1[%c29] : memref<87xf32, #tpu.memory_space<smem>>
    %c30 = arith.constant 30 : index
    %30 = memref.load %arg1[%c30] : memref<87xf32, #tpu.memory_space<smem>>
    %c31 = arith.constant 31 : index
    %31 = memref.load %arg1[%c31] : memref<87xf32, #tpu.memory_space<smem>>
    %c32 = arith.constant 32 : index
    %32 = memref.load %arg1[%c32] : memref<87xf32, #tpu.memory_space<smem>>
    %c33 = arith.constant 33 : index
    %33 = memref.load %arg1[%c33] : memref<87xf32, #tpu.memory_space<smem>>
    %c34 = arith.constant 34 : index
    %34 = memref.load %arg1[%c34] : memref<87xf32, #tpu.memory_space<smem>>
    %c35 = arith.constant 35 : index
    %35 = memref.load %arg1[%c35] : memref<87xf32, #tpu.memory_space<smem>>
    %c36 = arith.constant 36 : index
    %36 = memref.load %arg1[%c36] : memref<87xf32, #tpu.memory_space<smem>>
    %c37 = arith.constant 37 : index
    %37 = memref.load %arg1[%c37] : memref<87xf32, #tpu.memory_space<smem>>
    %c38 = arith.constant 38 : index
    %38 = memref.load %arg1[%c38] : memref<87xf32, #tpu.memory_space<smem>>
    %c39 = arith.constant 39 : index
    %39 = memref.load %arg1[%c39] : memref<87xf32, #tpu.memory_space<smem>>
    %c40 = arith.constant 40 : index
    %40 = memref.load %arg1[%c40] : memref<87xf32, #tpu.memory_space<smem>>
    %c41 = arith.constant 41 : index
    %41 = memref.load %arg1[%c41] : memref<87xf32, #tpu.memory_space<smem>>
    %c42 = arith.constant 42 : index
    %42 = memref.load %arg1[%c42] : memref<87xf32, #tpu.memory_space<smem>>
    %c43 = arith.constant 43 : index
    %43 = memref.load %arg1[%c43] : memref<87xf32, #tpu.memory_space<smem>>
    %c44 = arith.constant 44 : index
    %44 = memref.load %arg1[%c44] : memref<87xf32, #tpu.memory_space<smem>>
    %c45 = arith.constant 45 : index
    %45 = memref.load %arg1[%c45] : memref<87xf32, #tpu.memory_space<smem>>
    %c46 = arith.constant 46 : index
    %46 = memref.load %arg1[%c46] : memref<87xf32, #tpu.memory_space<smem>>
    %c47 = arith.constant 47 : index
    %47 = memref.load %arg1[%c47] : memref<87xf32, #tpu.memory_space<smem>>
    %c48 = arith.constant 48 : index
    %48 = memref.load %arg1[%c48] : memref<87xf32, #tpu.memory_space<smem>>
    %c49 = arith.constant 49 : index
    %49 = memref.load %arg1[%c49] : memref<87xf32, #tpu.memory_space<smem>>
    %c50 = arith.constant 50 : index
    %50 = memref.load %arg1[%c50] : memref<87xf32, #tpu.memory_space<smem>>
    %c51 = arith.constant 51 : index
    %51 = memref.load %arg1[%c51] : memref<87xf32, #tpu.memory_space<smem>>
    %c52 = arith.constant 52 : index
    %52 = memref.load %arg1[%c52] : memref<87xf32, #tpu.memory_space<smem>>
    %c53 = arith.constant 53 : index
    %53 = memref.load %arg1[%c53] : memref<87xf32, #tpu.memory_space<smem>>
    %c54 = arith.constant 54 : index
    %54 = memref.load %arg1[%c54] : memref<87xf32, #tpu.memory_space<smem>>
    %c55 = arith.constant 55 : index
    %55 = memref.load %arg1[%c55] : memref<87xf32, #tpu.memory_space<smem>>
    %c56 = arith.constant 56 : index
    %56 = memref.load %arg1[%c56] : memref<87xf32, #tpu.memory_space<smem>>
    %c57 = arith.constant 57 : index
    %57 = memref.load %arg1[%c57] : memref<87xf32, #tpu.memory_space<smem>>
    %c58 = arith.constant 58 : index
    %58 = memref.load %arg1[%c58] : memref<87xf32, #tpu.memory_space<smem>>
    %c59 = arith.constant 59 : index
    %59 = memref.load %arg1[%c59] : memref<87xf32, #tpu.memory_space<smem>>
    %c60 = arith.constant 60 : index
    %60 = memref.load %arg1[%c60] : memref<87xf32, #tpu.memory_space<smem>>
    %c61 = arith.constant 61 : index
    %61 = memref.load %arg1[%c61] : memref<87xf32, #tpu.memory_space<smem>>
    %c62 = arith.constant 62 : index
    %62 = memref.load %arg1[%c62] : memref<87xf32, #tpu.memory_space<smem>>
    %c63 = arith.constant 63 : index
    %63 = memref.load %arg1[%c63] : memref<87xf32, #tpu.memory_space<smem>>
    %c64 = arith.constant 64 : index
    %64 = memref.load %arg1[%c64] : memref<87xf32, #tpu.memory_space<smem>>
    %c65 = arith.constant 65 : index
    %65 = memref.load %arg1[%c65] : memref<87xf32, #tpu.memory_space<smem>>
    %c66 = arith.constant 66 : index
    %66 = memref.load %arg1[%c66] : memref<87xf32, #tpu.memory_space<smem>>
    %c67 = arith.constant 67 : index
    %67 = memref.load %arg1[%c67] : memref<87xf32, #tpu.memory_space<smem>>
    %c68 = arith.constant 68 : index
    %68 = memref.load %arg1[%c68] : memref<87xf32, #tpu.memory_space<smem>>
    %c69 = arith.constant 69 : index
    %69 = memref.load %arg1[%c69] : memref<87xf32, #tpu.memory_space<smem>>
    %c70 = arith.constant 70 : index
    %70 = memref.load %arg1[%c70] : memref<87xf32, #tpu.memory_space<smem>>
    %c71 = arith.constant 71 : index
    %71 = memref.load %arg1[%c71] : memref<87xf32, #tpu.memory_space<smem>>
    %c72 = arith.constant 72 : index
    %72 = memref.load %arg1[%c72] : memref<87xf32, #tpu.memory_space<smem>>
    %c73 = arith.constant 73 : index
    %73 = memref.load %arg1[%c73] : memref<87xf32, #tpu.memory_space<smem>>
    %c74 = arith.constant 74 : index
    %74 = memref.load %arg1[%c74] : memref<87xf32, #tpu.memory_space<smem>>
    %c75 = arith.constant 75 : index
    %75 = memref.load %arg1[%c75] : memref<87xf32, #tpu.memory_space<smem>>
    %c76 = arith.constant 76 : index
    %76 = memref.load %arg1[%c76] : memref<87xf32, #tpu.memory_space<smem>>
    %c77 = arith.constant 77 : index
    %77 = memref.load %arg1[%c77] : memref<87xf32, #tpu.memory_space<smem>>
    %c78 = arith.constant 78 : index
    %78 = memref.load %arg1[%c78] : memref<87xf32, #tpu.memory_space<smem>>
    %c79 = arith.constant 79 : index
    %79 = memref.load %arg1[%c79] : memref<87xf32, #tpu.memory_space<smem>>
    %c80 = arith.constant 80 : index
    %80 = memref.load %arg1[%c80] : memref<87xf32, #tpu.memory_space<smem>>
    %c81 = arith.constant 81 : index
    %81 = memref.load %arg1[%c81] : memref<87xf32, #tpu.memory_space<smem>>
    %c82 = arith.constant 82 : index
    %82 = memref.load %arg1[%c82] : memref<87xf32, #tpu.memory_space<smem>>
    %c83 = arith.constant 83 : index
    %83 = memref.load %arg1[%c83] : memref<87xf32, #tpu.memory_space<smem>>
    %c84 = arith.constant 84 : index
    %84 = memref.load %arg1[%c84] : memref<87xf32, #tpu.memory_space<smem>>
    %c85 = arith.constant 85 : index
    %85 = memref.load %arg1[%c85] : memref<87xf32, #tpu.memory_space<smem>>
    %c86 = arith.constant 86 : index
    %86 = memref.load %arg1[%c86] : memref<87xf32, #tpu.memory_space<smem>>
    %c0_i32 = arith.constant 0 : i32
    %c16_i32 = arith.constant 16 : i32
    %87 = arith.muli %c0_i32, %c16_i32 : i32
    %88 = tpu.assume_multiple %87, 16 : i32
    %c0_0 = arith.constant 0 : index
    %89 = arith.index_cast %88 : i32 to index
    %c0_1 = arith.constant 0 : index
    %90 = vector.load %arg2[%c0_0, %89, %c0_1] : memref<8x16x128xf32, #tpu.memory_space<vmem>>, vector<1x16x128xf32>
    %91 = vector.shape_cast %90 : vector<1x16x128xf32> to vector<16x128xf32>
    %c1_2 = arith.constant 1 : index
    %92 = arith.index_cast %88 : i32 to index
    %c0_3 = arith.constant 0 : index
    %93 = vector.load %arg2[%c1_2, %92, %c0_3] : memref<8x16x128xf32, #tpu.memory_space<vmem>>, vector<1x16x128xf32>
    %94 = vector.shape_cast %93 : vector<1x16x128xf32> to vector<16x128xf32>
    %c2_4 = arith.constant 2 : index
    %95 = arith.index_cast %88 : i32 to index
    %c0_5 = arith.constant 0 : index
    %96 = vector.load %arg2[%c2_4, %95, %c0_5] : memref<8x16x128xf32, #tpu.memory_space<vmem>>, vector<1x16x128xf32>
    %97 = vector.shape_cast %96 : vector<1x16x128xf32> to vector<16x128xf32>
    %c3_6 = arith.constant 3 : index
    %98 = arith.index_cast %88 : i32 to index
    %c0_7 = arith.constant 0 : index
    %99 = vector.load %arg2[%c3_6, %98, %c0_7] : memref<8x16x128xf32, #tpu.memory_space<vmem>>, vector<1x16x128xf32>
    %100 = vector.shape_cast %99 : vector<1x16x128xf32> to vector<16x128xf32>
    %c4_8 = arith.constant 4 : index
    %101 = arith.index_cast %88 : i32 to index
    %c0_9 = arith.constant 0 : index
    %102 = vector.load %arg2[%c4_8, %101, %c0_9] : memref<8x16x128xf32, #tpu.memory_space<vmem>>, vector<1x16x128xf32>
    %103 = vector.shape_cast %102 : vector<1x16x128xf32> to vector<16x128xf32>
    %c5_10 = arith.constant 5 : index
    %104 = arith.index_cast %88 : i32 to index
    %c0_11 = arith.constant 0 : index
    %105 = vector.load %arg2[%c5_10, %104, %c0_11] : memref<8x16x128xf32, #tpu.memory_space<vmem>>, vector<1x16x128xf32>
    %106 = vector.shape_cast %105 : vector<1x16x128xf32> to vector<16x128xf32>
    %c6_12 = arith.constant 6 : index
    %107 = arith.index_cast %88 : i32 to index
    %c0_13 = arith.constant 0 : index
    %108 = vector.load %arg2[%c6_12, %107, %c0_13] : memref<8x16x128xf32, #tpu.memory_space<vmem>>, vector<1x16x128xf32>
    %109 = vector.shape_cast %108 : vector<1x16x128xf32> to vector<16x128xf32>
    %c7_14 = arith.constant 7 : index
    %110 = arith.index_cast %88 : i32 to index
    %c0_15 = arith.constant 0 : index
    %111 = vector.load %arg2[%c7_14, %110, %c0_15] : memref<8x16x128xf32, #tpu.memory_space<vmem>>, vector<1x16x128xf32>
    %112 = vector.shape_cast %111 : vector<1x16x128xf32> to vector<16x128xf32>
    %113 = vector.broadcast %0 : f32 to vector<16x128xf32>
    %114 = arith.mulf %91, %113 : vector<16x128xf32>
    %115 = vector.broadcast %1 : f32 to vector<16x128xf32>
    %116 = arith.mulf %94, %115 : vector<16x128xf32>
    %117 = arith.addf %114, %116 : vector<16x128xf32>
    %118 = vector.broadcast %2 : f32 to vector<16x128xf32>
    %119 = arith.mulf %97, %118 : vector<16x128xf32>
    %120 = arith.addf %117, %119 : vector<16x128xf32>
    %121 = vector.broadcast %3 : f32 to vector<16x128xf32>
    %122 = arith.mulf %100, %121 : vector<16x128xf32>
    %123 = arith.addf %120, %122 : vector<16x128xf32>
    %124 = vector.broadcast %4 : f32 to vector<16x128xf32>
    %125 = arith.mulf %103, %124 : vector<16x128xf32>
    %126 = arith.addf %123, %125 : vector<16x128xf32>
    %127 = vector.broadcast %5 : f32 to vector<16x128xf32>
    %128 = arith.mulf %106, %127 : vector<16x128xf32>
    %129 = arith.addf %126, %128 : vector<16x128xf32>
    %130 = vector.broadcast %6 : f32 to vector<16x128xf32>
    %131 = arith.mulf %109, %130 : vector<16x128xf32>
    %132 = arith.addf %129, %131 : vector<16x128xf32>
    %133 = vector.broadcast %7 : f32 to vector<16x128xf32>
    %134 = arith.mulf %112, %133 : vector<16x128xf32>
    %135 = arith.addf %132, %134 : vector<16x128xf32>
    %136 = vector.broadcast %48 : f32 to vector<16x128xf32>
    %137 = arith.addf %135, %136 : vector<16x128xf32>
    %cst = arith.constant 0.000000e+00 : f32
    %138 = vector.broadcast %cst : f32 to vector<16x128xf32>
    %139 = arith.subf %138, %137 : vector<16x128xf32>
    %140 = math.exp %139 : vector<16x128xf32>
    %cst_16 = arith.constant 1.000000e+00 : f32
    %141 = vector.broadcast %cst_16 : f32 to vector<16x128xf32>
    %142 = arith.addf %141, %140 : vector<16x128xf32>
    %cst_17 = arith.constant 1.000000e+00 : f32
    %143 = vector.broadcast %cst_17 : f32 to vector<16x128xf32>
    %144 = arith.divf %143, %142 : vector<16x128xf32>
    %145 = vector.broadcast %8 : f32 to vector<16x128xf32>
    %146 = arith.mulf %91, %145 : vector<16x128xf32>
    %147 = vector.broadcast %9 : f32 to vector<16x128xf32>
    %148 = arith.mulf %94, %147 : vector<16x128xf32>
    %149 = arith.addf %146, %148 : vector<16x128xf32>
    %150 = vector.broadcast %10 : f32 to vector<16x128xf32>
    %151 = arith.mulf %97, %150 : vector<16x128xf32>
    %152 = arith.addf %149, %151 : vector<16x128xf32>
    %153 = vector.broadcast %11 : f32 to vector<16x128xf32>
    %154 = arith.mulf %100, %153 : vector<16x128xf32>
    %155 = arith.addf %152, %154 : vector<16x128xf32>
    %156 = vector.broadcast %12 : f32 to vector<16x128xf32>
    %157 = arith.mulf %103, %156 : vector<16x128xf32>
    %158 = arith.addf %155, %157 : vector<16x128xf32>
    %159 = vector.broadcast %13 : f32 to vector<16x128xf32>
    %160 = arith.mulf %106, %159 : vector<16x128xf32>
    %161 = arith.addf %158, %160 : vector<16x128xf32>
    %162 = vector.broadcast %14 : f32 to vector<16x128xf32>
    %163 = arith.mulf %109, %162 : vector<16x128xf32>
    %164 = arith.addf %161, %163 : vector<16x128xf32>
    %165 = vector.broadcast %15 : f32 to vector<16x128xf32>
    %166 = arith.mulf %112, %165 : vector<16x128xf32>
    %167 = arith.addf %164, %166 : vector<16x128xf32>
    %168 = vector.broadcast %49 : f32 to vector<16x128xf32>
    %169 = arith.addf %167, %168 : vector<16x128xf32>
    %cst_18 = arith.constant 0.000000e+00 : f32
    %170 = vector.broadcast %cst_18 : f32 to vector<16x128xf32>
    %171 = arith.subf %170, %169 : vector<16x128xf32>
    %172 = math.exp %171 : vector<16x128xf32>
    %cst_19 = arith.constant 1.000000e+00 : f32
    %173 = vector.broadcast %cst_19 : f32 to vector<16x128xf32>
    %174 = arith.addf %173, %172 : vector<16x128xf32>
    %cst_20 = arith.constant 1.000000e+00 : f32
    %175 = vector.broadcast %cst_20 : f32 to vector<16x128xf32>
    %176 = arith.divf %175, %174 : vector<16x128xf32>
    %177 = vector.broadcast %16 : f32 to vector<16x128xf32>
    %178 = arith.mulf %91, %177 : vector<16x128xf32>
    %179 = vector.broadcast %17 : f32 to vector<16x128xf32>
    %180 = arith.mulf %94, %179 : vector<16x128xf32>
    %181 = arith.addf %178, %180 : vector<16x128xf32>
    %182 = vector.broadcast %18 : f32 to vector<16x128xf32>
    %183 = arith.mulf %97, %182 : vector<16x128xf32>
    %184 = arith.addf %181, %183 : vector<16x128xf32>
    %185 = vector.broadcast %19 : f32 to vector<16x128xf32>
    %186 = arith.mulf %100, %185 : vector<16x128xf32>
    %187 = arith.addf %184, %186 : vector<16x128xf32>
    %188 = vector.broadcast %20 : f32 to vector<16x128xf32>
    %189 = arith.mulf %103, %188 : vector<16x128xf32>
    %190 = arith.addf %187, %189 : vector<16x128xf32>
    %191 = vector.broadcast %21 : f32 to vector<16x128xf32>
    %192 = arith.mulf %106, %191 : vector<16x128xf32>
    %193 = arith.addf %190, %192 : vector<16x128xf32>
    %194 = vector.broadcast %22 : f32 to vector<16x128xf32>
    %195 = arith.mulf %109, %194 : vector<16x128xf32>
    %196 = arith.addf %193, %195 : vector<16x128xf32>
    %197 = vector.broadcast %23 : f32 to vector<16x128xf32>
    %198 = arith.mulf %112, %197 : vector<16x128xf32>
    %199 = arith.addf %196, %198 : vector<16x128xf32>
    %200 = vector.broadcast %50 : f32 to vector<16x128xf32>
    %201 = arith.addf %199, %200 : vector<16x128xf32>
    %cst_21 = arith.constant 0.000000e+00 : f32
    %202 = vector.broadcast %cst_21 : f32 to vector<16x128xf32>
    %203 = arith.subf %202, %201 : vector<16x128xf32>
    %204 = math.exp %203 : vector<16x128xf32>
    %cst_22 = arith.constant 1.000000e+00 : f32
    %205 = vector.broadcast %cst_22 : f32 to vector<16x128xf32>
    %206 = arith.addf %205, %204 : vector<16x128xf32>
    %cst_23 = arith.constant 1.000000e+00 : f32
    %207 = vector.broadcast %cst_23 : f32 to vector<16x128xf32>
    %208 = arith.divf %207, %206 : vector<16x128xf32>
    %209 = vector.broadcast %24 : f32 to vector<16x128xf32>
    %210 = arith.mulf %91, %209 : vector<16x128xf32>
    %211 = vector.broadcast %25 : f32 to vector<16x128xf32>
    %212 = arith.mulf %94, %211 : vector<16x128xf32>
    %213 = arith.addf %210, %212 : vector<16x128xf32>
    %214 = vector.broadcast %26 : f32 to vector<16x128xf32>
    %215 = arith.mulf %97, %214 : vector<16x128xf32>
    %216 = arith.addf %213, %215 : vector<16x128xf32>
    %217 = vector.broadcast %27 : f32 to vector<16x128xf32>
    %218 = arith.mulf %100, %217 : vector<16x128xf32>
    %219 = arith.addf %216, %218 : vector<16x128xf32>
    %220 = vector.broadcast %28 : f32 to vector<16x128xf32>
    %221 = arith.mulf %103, %220 : vector<16x128xf32>
    %222 = arith.addf %219, %221 : vector<16x128xf32>
    %223 = vector.broadcast %29 : f32 to vector<16x128xf32>
    %224 = arith.mulf %106, %223 : vector<16x128xf32>
    %225 = arith.addf %222, %224 : vector<16x128xf32>
    %226 = vector.broadcast %30 : f32 to vector<16x128xf32>
    %227 = arith.mulf %109, %226 : vector<16x128xf32>
    %228 = arith.addf %225, %227 : vector<16x128xf32>
    %229 = vector.broadcast %31 : f32 to vector<16x128xf32>
    %230 = arith.mulf %112, %229 : vector<16x128xf32>
    %231 = arith.addf %228, %230 : vector<16x128xf32>
    %232 = vector.broadcast %51 : f32 to vector<16x128xf32>
    %233 = arith.addf %231, %232 : vector<16x128xf32>
    %cst_24 = arith.constant 0.000000e+00 : f32
    %234 = vector.broadcast %cst_24 : f32 to vector<16x128xf32>
    %235 = arith.subf %234, %233 : vector<16x128xf32>
    %236 = math.exp %235 : vector<16x128xf32>
    %cst_25 = arith.constant 1.000000e+00 : f32
    %237 = vector.broadcast %cst_25 : f32 to vector<16x128xf32>
    %238 = arith.addf %237, %236 : vector<16x128xf32>
    %cst_26 = arith.constant 1.000000e+00 : f32
    %239 = vector.broadcast %cst_26 : f32 to vector<16x128xf32>
    %240 = arith.divf %239, %238 : vector<16x128xf32>
    %241 = vector.broadcast %32 : f32 to vector<16x128xf32>
    %242 = arith.mulf %91, %241 : vector<16x128xf32>
    %243 = vector.broadcast %33 : f32 to vector<16x128xf32>
    %244 = arith.mulf %94, %243 : vector<16x128xf32>
    %245 = arith.addf %242, %244 : vector<16x128xf32>
    %246 = vector.broadcast %34 : f32 to vector<16x128xf32>
    %247 = arith.mulf %97, %246 : vector<16x128xf32>
    %248 = arith.addf %245, %247 : vector<16x128xf32>
    %249 = vector.broadcast %35 : f32 to vector<16x128xf32>
    %250 = arith.mulf %100, %249 : vector<16x128xf32>
    %251 = arith.addf %248, %250 : vector<16x128xf32>
    %252 = vector.broadcast %36 : f32 to vector<16x128xf32>
    %253 = arith.mulf %103, %252 : vector<16x128xf32>
    %254 = arith.addf %251, %253 : vector<16x128xf32>
    %255 = vector.broadcast %37 : f32 to vector<16x128xf32>
    %256 = arith.mulf %106, %255 : vector<16x128xf32>
    %257 = arith.addf %254, %256 : vector<16x128xf32>
    %258 = vector.broadcast %38 : f32 to vector<16x128xf32>
    %259 = arith.mulf %109, %258 : vector<16x128xf32>
    %260 = arith.addf %257, %259 : vector<16x128xf32>
    %261 = vector.broadcast %39 : f32 to vector<16x128xf32>
    %262 = arith.mulf %112, %261 : vector<16x128xf32>
    %263 = arith.addf %260, %262 : vector<16x128xf32>
    %264 = vector.broadcast %52 : f32 to vector<16x128xf32>
    %265 = arith.addf %263, %264 : vector<16x128xf32>
    %cst_27 = arith.constant 0.000000e+00 : f32
    %266 = vector.broadcast %cst_27 : f32 to vector<16x128xf32>
    %267 = arith.subf %266, %265 : vector<16x128xf32>
    %268 = math.exp %267 : vector<16x128xf32>
    %cst_28 = arith.constant 1.000000e+00 : f32
    %269 = vector.broadcast %cst_28 : f32 to vector<16x128xf32>
    %270 = arith.addf %269, %268 : vector<16x128xf32>
    %cst_29 = arith.constant 1.000000e+00 : f32
    %271 = vector.broadcast %cst_29 : f32 to vector<16x128xf32>
    %272 = arith.divf %271, %270 : vector<16x128xf32>
    %273 = vector.broadcast %40 : f32 to vector<16x128xf32>
    %274 = arith.mulf %91, %273 : vector<16x128xf32>
    %275 = vector.broadcast %41 : f32 to vector<16x128xf32>
    %276 = arith.mulf %94, %275 : vector<16x128xf32>
    %277 = arith.addf %274, %276 : vector<16x128xf32>
    %278 = vector.broadcast %42 : f32 to vector<16x128xf32>
    %279 = arith.mulf %97, %278 : vector<16x128xf32>
    %280 = arith.addf %277, %279 : vector<16x128xf32>
    %281 = vector.broadcast %43 : f32 to vector<16x128xf32>
    %282 = arith.mulf %100, %281 : vector<16x128xf32>
    %283 = arith.addf %280, %282 : vector<16x128xf32>
    %284 = vector.broadcast %44 : f32 to vector<16x128xf32>
    %285 = arith.mulf %103, %284 : vector<16x128xf32>
    %286 = arith.addf %283, %285 : vector<16x128xf32>
    %287 = vector.broadcast %45 : f32 to vector<16x128xf32>
    %288 = arith.mulf %106, %287 : vector<16x128xf32>
    %289 = arith.addf %286, %288 : vector<16x128xf32>
    %290 = vector.broadcast %46 : f32 to vector<16x128xf32>
    %291 = arith.mulf %109, %290 : vector<16x128xf32>
    %292 = arith.addf %289, %291 : vector<16x128xf32>
    %293 = vector.broadcast %47 : f32 to vector<16x128xf32>
    %294 = arith.mulf %112, %293 : vector<16x128xf32>
    %295 = arith.addf %292, %294 : vector<16x128xf32>
    %296 = vector.broadcast %53 : f32 to vector<16x128xf32>
    %297 = arith.addf %295, %296 : vector<16x128xf32>
    %cst_30 = arith.constant 0.000000e+00 : f32
    %298 = vector.broadcast %cst_30 : f32 to vector<16x128xf32>
    %299 = arith.subf %298, %297 : vector<16x128xf32>
    %300 = math.exp %299 : vector<16x128xf32>
    %cst_31 = arith.constant 1.000000e+00 : f32
    %301 = vector.broadcast %cst_31 : f32 to vector<16x128xf32>
    %302 = arith.addf %301, %300 : vector<16x128xf32>
    %cst_32 = arith.constant 1.000000e+00 : f32
    %303 = vector.broadcast %cst_32 : f32 to vector<16x128xf32>
    %304 = arith.divf %303, %302 : vector<16x128xf32>
    %305 = vector.broadcast %54 : f32 to vector<16x128xf32>
    %306 = arith.mulf %144, %305 : vector<16x128xf32>
    %307 = vector.broadcast %55 : f32 to vector<16x128xf32>
    %308 = arith.mulf %176, %307 : vector<16x128xf32>
    %309 = arith.addf %306, %308 : vector<16x128xf32>
    %310 = vector.broadcast %56 : f32 to vector<16x128xf32>
    %311 = arith.mulf %208, %310 : vector<16x128xf32>
    %312 = arith.addf %309, %311 : vector<16x128xf32>
    %313 = vector.broadcast %57 : f32 to vector<16x128xf32>
    %314 = arith.mulf %240, %313 : vector<16x128xf32>
    %315 = arith.addf %312, %314 : vector<16x128xf32>
    %316 = vector.broadcast %58 : f32 to vector<16x128xf32>
    %317 = arith.mulf %272, %316 : vector<16x128xf32>
    %318 = arith.addf %315, %317 : vector<16x128xf32>
    %319 = vector.broadcast %59 : f32 to vector<16x128xf32>
    %320 = arith.mulf %304, %319 : vector<16x128xf32>
    %321 = arith.addf %318, %320 : vector<16x128xf32>
    %322 = vector.broadcast %78 : f32 to vector<16x128xf32>
    %323 = arith.addf %321, %322 : vector<16x128xf32>
    %cst_33 = arith.constant 0.000000e+00 : f32
    %324 = vector.broadcast %cst_33 : f32 to vector<16x128xf32>
    %325 = arith.subf %324, %323 : vector<16x128xf32>
    %326 = math.exp %325 : vector<16x128xf32>
    %cst_34 = arith.constant 1.000000e+00 : f32
    %327 = vector.broadcast %cst_34 : f32 to vector<16x128xf32>
    %328 = arith.addf %327, %326 : vector<16x128xf32>
    %cst_35 = arith.constant 1.000000e+00 : f32
    %329 = vector.broadcast %cst_35 : f32 to vector<16x128xf32>
    %330 = arith.divf %329, %328 : vector<16x128xf32>
    %331 = vector.broadcast %60 : f32 to vector<16x128xf32>
    %332 = arith.mulf %144, %331 : vector<16x128xf32>
    %333 = vector.broadcast %61 : f32 to vector<16x128xf32>
    %334 = arith.mulf %176, %333 : vector<16x128xf32>
    %335 = arith.addf %332, %334 : vector<16x128xf32>
    %336 = vector.broadcast %62 : f32 to vector<16x128xf32>
    %337 = arith.mulf %208, %336 : vector<16x128xf32>
    %338 = arith.addf %335, %337 : vector<16x128xf32>
    %339 = vector.broadcast %63 : f32 to vector<16x128xf32>
    %340 = arith.mulf %240, %339 : vector<16x128xf32>
    %341 = arith.addf %338, %340 : vector<16x128xf32>
    %342 = vector.broadcast %64 : f32 to vector<16x128xf32>
    %343 = arith.mulf %272, %342 : vector<16x128xf32>
    %344 = arith.addf %341, %343 : vector<16x128xf32>
    %345 = vector.broadcast %65 : f32 to vector<16x128xf32>
    %346 = arith.mulf %304, %345 : vector<16x128xf32>
    %347 = arith.addf %344, %346 : vector<16x128xf32>
    %348 = vector.broadcast %79 : f32 to vector<16x128xf32>
    %349 = arith.addf %347, %348 : vector<16x128xf32>
    %cst_36 = arith.constant 0.000000e+00 : f32
    %350 = vector.broadcast %cst_36 : f32 to vector<16x128xf32>
    %351 = arith.subf %350, %349 : vector<16x128xf32>
    %352 = math.exp %351 : vector<16x128xf32>
    %cst_37 = arith.constant 1.000000e+00 : f32
    %353 = vector.broadcast %cst_37 : f32 to vector<16x128xf32>
    %354 = arith.addf %353, %352 : vector<16x128xf32>
    %cst_38 = arith.constant 1.000000e+00 : f32
    %355 = vector.broadcast %cst_38 : f32 to vector<16x128xf32>
    %356 = arith.divf %355, %354 : vector<16x128xf32>
    %357 = vector.broadcast %66 : f32 to vector<16x128xf32>
    %358 = arith.mulf %144, %357 : vector<16x128xf32>
    %359 = vector.broadcast %67 : f32 to vector<16x128xf32>
    %360 = arith.mulf %176, %359 : vector<16x128xf32>
    %361 = arith.addf %358, %360 : vector<16x128xf32>
    %362 = vector.broadcast %68 : f32 to vector<16x128xf32>
    %363 = arith.mulf %208, %362 : vector<16x128xf32>
    %364 = arith.addf %361, %363 : vector<16x128xf32>
    %365 = vector.broadcast %69 : f32 to vector<16x128xf32>
    %366 = arith.mulf %240, %365 : vector<16x128xf32>
    %367 = arith.addf %364, %366 : vector<16x128xf32>
    %368 = vector.broadcast %70 : f32 to vector<16x128xf32>
    %369 = arith.mulf %272, %368 : vector<16x128xf32>
    %370 = arith.addf %367, %369 : vector<16x128xf32>
    %371 = vector.broadcast %71 : f32 to vector<16x128xf32>
    %372 = arith.mulf %304, %371 : vector<16x128xf32>
    %373 = arith.addf %370, %372 : vector<16x128xf32>
    %374 = vector.broadcast %80 : f32 to vector<16x128xf32>
    %375 = arith.addf %373, %374 : vector<16x128xf32>
    %cst_39 = arith.constant 0.000000e+00 : f32
    %376 = vector.broadcast %cst_39 : f32 to vector<16x128xf32>
    %377 = arith.subf %376, %375 : vector<16x128xf32>
    %378 = math.exp %377 : vector<16x128xf32>
    %cst_40 = arith.constant 1.000000e+00 : f32
    %379 = vector.broadcast %cst_40 : f32 to vector<16x128xf32>
    %380 = arith.addf %379, %378 : vector<16x128xf32>
    %cst_41 = arith.constant 1.000000e+00 : f32
    %381 = vector.broadcast %cst_41 : f32 to vector<16x128xf32>
    %382 = arith.divf %381, %380 : vector<16x128xf32>
    %383 = vector.broadcast %72 : f32 to vector<16x128xf32>
    %384 = arith.mulf %144, %383 : vector<16x128xf32>
    %385 = vector.broadcast %73 : f32 to vector<16x128xf32>
    %386 = arith.mulf %176, %385 : vector<16x128xf32>
    %387 = arith.addf %384, %386 : vector<16x128xf32>
    %388 = vector.broadcast %74 : f32 to vector<16x128xf32>
    %389 = arith.mulf %208, %388 : vector<16x128xf32>
    %390 = arith.addf %387, %389 : vector<16x128xf32>
    %391 = vector.broadcast %75 : f32 to vector<16x128xf32>
    %392 = arith.mulf %240, %391 : vector<16x128xf32>
    %393 = arith.addf %390, %392 : vector<16x128xf32>
    %394 = vector.broadcast %76 : f32 to vector<16x128xf32>
    %395 = arith.mulf %272, %394 : vector<16x128xf32>
    %396 = arith.addf %393, %395 : vector<16x128xf32>
    %397 = vector.broadcast %77 : f32 to vector<16x128xf32>
    %398 = arith.mulf %304, %397 : vector<16x128xf32>
    %399 = arith.addf %396, %398 : vector<16x128xf32>
    %400 = vector.broadcast %81 : f32 to vector<16x128xf32>
    %401 = arith.addf %399, %400 : vector<16x128xf32>
    %cst_42 = arith.constant 0.000000e+00 : f32
    %402 = vector.broadcast %cst_42 : f32 to vector<16x128xf32>
    %403 = arith.subf %402, %401 : vector<16x128xf32>
    %404 = math.exp %403 : vector<16x128xf32>
    %cst_43 = arith.constant 1.000000e+00 : f32
    %405 = vector.broadcast %cst_43 : f32 to vector<16x128xf32>
    %406 = arith.addf %405, %404 : vector<16x128xf32>
    %cst_44 = arith.constant 1.000000e+00 : f32
    %407 = vector.broadcast %cst_44 : f32 to vector<16x128xf32>
    %408 = arith.divf %407, %406 : vector<16x128xf32>
    %409 = vector.broadcast %82 : f32 to vector<16x128xf32>
    %410 = arith.mulf %330, %409 : vector<16x128xf32>
    %411 = vector.broadcast %83 : f32 to vector<16x128xf32>
    %412 = arith.mulf %356, %411 : vector<16x128xf32>
    %413 = arith.addf %410, %412 : vector<16x128xf32>
    %414 = vector.broadcast %84 : f32 to vector<16x128xf32>
    %415 = arith.mulf %382, %414 : vector<16x128xf32>
    %416 = arith.addf %413, %415 : vector<16x128xf32>
    %417 = vector.broadcast %85 : f32 to vector<16x128xf32>
    %418 = arith.mulf %408, %417 : vector<16x128xf32>
    %419 = arith.addf %416, %418 : vector<16x128xf32>
    %420 = vector.broadcast %86 : f32 to vector<16x128xf32>
    %421 = arith.addf %419, %420 : vector<16x128xf32>
    %cst_45 = arith.constant 0.000000e+00 : f32
    %422 = vector.broadcast %cst_45 : f32 to vector<16x128xf32>
    %423 = arith.subf %422, %421 : vector<16x128xf32>
    %424 = math.exp %423 : vector<16x128xf32>
    %cst_46 = arith.constant 1.000000e+00 : f32
    %425 = vector.broadcast %cst_46 : f32 to vector<16x128xf32>
    %426 = arith.addf %425, %424 : vector<16x128xf32>
    %cst_47 = arith.constant 1.000000e+00 : f32
    %427 = vector.broadcast %cst_47 : f32 to vector<16x128xf32>
    %428 = arith.divf %427, %426 : vector<16x128xf32>
    %429 = arith.index_cast %88 : i32 to index
    %c0_48 = arith.constant 0 : index
    %430 = vector.load %arg3[%429, %c0_48] : memref<16x128xf32, #tpu.memory_space<vmem>>, vector<16x128xf32>
    tpu.vector_store %arg3[%429, %c0_48], %428 {strides = array<i32>} : memref<16x128xf32, #tpu.memory_space<vmem>>, vector<16x128xf32>,
    %c1_i32 = arith.constant 1 : i32
    return
  }
  func.func @transform_0(%arg0: i32, %arg1: memref<87xf32, #tpu.memory_space<smem>>) -> (i32, i32, i32) {
    %c0_i32 = arith.constant 0 : i32
    %c0_i32_0 = arith.constant 0 : i32
    %c0_i32_1 = arith.constant 0 : i32
    return %c0_i32, %arg0, %c0_i32_0 : i32, i32, i32
  }
  func.func @transform_1(%arg0: i32, %arg1: memref<87xf32, #tpu.memory_space<smem>>) -> (i32, i32) {
    %c0_i32 = arith.constant 0 : i32
    %c0_i32_0 = arith.constant 0 : i32
    return %arg0, %c0_i32 : i32, i32
  }
}

</mosaic_0001>

<llo_original>
// kernel: mlp_forward.1
$region0: #{mlp_forward.1}
  #allocation0 [shape = 'u32[]', space=smem, size = 0x4, offset = 0x4, fixed_abs, tag = 'smem constant byte address 0x4 - core index']
  #allocation1 [shape = 'u32[144,128]{1,0:T(1,128)}', space=vmem, size = 0x12000, scoped, tag = 'internal scratch']
  #allocation2 [shape = 's32[1]{0}', space=sflag, size = 0x4, scoped, tag = 'scoped memory for mlp_forward.1']
  #allocation3 [shape = 'u8[512]{0}', space=smem, size = 0x200, scoped, tag = 'prefetched SMEM operand 0']
  %s0 = inlined_call_operand.vmem [shape: f32[87], index: 0, kind: input, shape index: {}]
  %s1 = inlined_call_operand.vmem [shape: f32[8,16,128], index: 1, kind: input, shape index: {}]
  %s2 = inlined_call_operand.vmem [shape: f32[16,128], index: 2, kind: output, shape index: {}]
  %s3 = sld [smem:[#allocation0]]
  $region14: #{mlp_forward.1} parent=0
    _
  %s5 = ssub.s32 1, %s3
  %s6 = scalar_select 0, %s5, %s3
  %s7 = sshll.u32 %s0, 4
  %s8 = int_to_ptr.vmem [resolvable:$true] %s7
  %10 = dma.vmem_to_smem %s8, 16, [#allocation3], [#allocation2]
  %11 = dma.done [#allocation2], 16
  %12 = sfence
  // Predicated region
  $region2: #{mlp_forward.1} parent=0 // pred_check
    _
  $region3: #{mlp_forward.1} parent=0 // pred_check_branch
    %14 = sbr.rel (0) target = $region5
  $region4: #{mlp_forward.1} parent=0 // pred_region
    _
  $region5: #{mlp_forward.1} parent=0 // pred_fallthru
    _
  %s15 = sld [smem:[#allocation3]]
  %s16 = sld [smem:[#allocation3 + $0x1]]
  %s17 = sld [smem:[#allocation3 + $0x2]]
  %s18 = sld [smem:[#allocation3 + $0x3]]
  %s19 = sld [smem:[#allocation3 + $0x4]]
  %s20 = sld [smem:[#allocation3 + $0x5]]
  %s21 = sld [smem:[#allocation3 + $0x6]]
  %s22 = sld [smem:[#allocation3 + $0x7]]
  %s23 = sld [smem:[#allocation3 + $0x8]]
  %s24 = sld [smem:[#allocation3 + $0x9]]
  %s25 = sld [smem:[#allocation3 + $0xa]]
  %s26 = sld [smem:[#allocation3 + $0xb]]
  %s27 = sld [smem:[#allocation3 + $0xc]]
  %s28 = sld [smem:[#allocation3 + $0xd]]
  %s29 = sld [smem:[#allocation3 + $0xe]]
  %s30 = sld [smem:[#allocation3 + $0xf]]
  %s31 = sld [smem:[#allocation3 + $0x10]]
  %s32 = sld [smem:[#allocation3 + $0x11]]
  %s33 = sld [smem:[#allocation3 + $0x12]]
  %s34 = sld [smem:[#allocation3 + $0x13]]
  %s35 = sld [smem:[#allocation3 + $0x14]]
  %s36 = sld [smem:[#allocation3 + $0x15]]
  %s37 = sld [smem:[#allocation3 + $0x16]]
  %s38 = sld [smem:[#allocation3 + $0x17]]
  %s39 = sld [smem:[#allocation3 + $0x18]]
  %s40 = sld [smem:[#allocation3 + $0x19]]
  %s41 = sld [smem:[#allocation3 + $0x1a]]
  %s42 = sld [smem:[#allocation3 + $0x1b]]
  %s43 = sld [smem:[#allocation3 + $0x1c]]
  %s44 = sld [smem:[#allocation3 + $0x1d]]
  %s45 = sld [smem:[#allocation3 + $0x1e]]
  %s46 = sld [smem:[#allocation3 + $0x1f]]
  %s47 = sld [smem:[#allocation3 + $0x20]]
  %s48 = sld [smem:[#allocation3 + $0x21]]
  %s49 = sld [smem:[#allocation3 + $0x22]]
  %s50 = sld [smem:[#allocation3 + $0x23]]
  %s51 = sld [smem:[#allocation3 + $0x24]]
  %s52 = sld [smem:[#allocation3 + $0x25]]
  %s53 = sld [smem:[#allocation3 + $0x26]]
  %s54 = sld [smem:[#allocation3 + $0x27]]
  %s55 = sld [smem:[#allocation3 + $0x28]]
  %s56 = sld [smem:[#allocation3 + $0x29]]
  %s57 = sld [smem:[#allocation3 + $0x2a]]
  %s58 = sld [smem:[#allocation3 + $0x2b]]
  %s59 = sld [smem:[#allocation3 + $0x2c]]
  %s60 = sld [smem:[#allocation3 + $0x2d]]
  %s61 = sld [smem:[#allocation3 + $0x2e]]
  %s62 = sld [smem:[#allocation3 + $0x2f]]
  %s63 = sld [smem:[#allocation3 + $0x30]]
  %s64 = sld [smem:[#allocation3 + $0x31]]
  %s65 = sld [smem:[#allocation3 + $0x32]]
  %s66 = sld [smem:[#allocation3 + $0x33]]
  %s67 = sld [smem:[#allocation3 + $0x34]]
  %s68 = sld [smem:[#allocation3 + $0x35]]
  %s69 = sld [smem:[#allocation3 + $0x36]]
  %s70 = sld [smem:[#allocation3 + $0x37]]
  %s71 = sld [smem:[#allocation3 + $0x38]]
  %s72 = sld [smem:[#allocation3 + $0x39]]
  %s73 = sld [smem:[#allocation3 + $0x3a]]
  %s74 = sld [smem:[#allocation3 + $0x3b]]
  %s75 = sld [smem:[#allocation3 + $0x3c]]
  %s76 = sld [smem:[#allocation3 + $0x3d]]
  %s77 = sld [smem:[#allocation3 + $0x3e]]
  %s78 = sld [smem:[#allocation3 + $0x3f]]
  %s79 = sld [smem:[#allocation3 + $0x40]]
  %s80 = sld [smem:[#allocation3 + $0x41]]
  %s81 = sld [smem:[#allocation3 + $0x42]]
  %s82 = sld [smem:[#allocation3 + $0x43]]
  %s83 = sld [smem:[#allocation3 + $0x44]]
  %s84 = sld [smem:[#allocation3 + $0x45]]
  %s85 = sld [smem:[#allocation3 + $0x46]]
  %s86 = sld [smem:[#allocation3 + $0x47]]
  %s87 = sld [smem:[#allocation3 + $0x48]]
  %s88 = sld [smem:[#allocation3 + $0x49]]
  %s89 = sld [smem:[#allocation3 + $0x4a]]
  %s90 = sld [smem:[#allocation3 + $0x4b]]
  %s91 = sld [smem:[#allocation3 + $0x4c]]
  %s92 = sld [smem:[#allocation3 + $0x4d]]
  %s93 = sld [smem:[#allocation3 + $0x4e]]
  %s94 = sld [smem:[#allocation3 + $0x4f]]
  %s95 = sld [smem:[#allocation3 + $0x50]]
  %s96 = sld [smem:[#allocation3 + $0x51]]
  %s97 = sld [smem:[#allocation3 + $0x52]]
  %s98 = sld [smem:[#allocation3 + $0x53]]
  %s99 = sld [smem:[#allocation3 + $0x54]]
  %s100 = sld [smem:[#allocation3 + $0x55]]
  %s101 = sld [smem:[#allocation3 + $0x56]]
  %v102 = vld [vmem:[%s1] sm:$0xff]
  %v103 = vld [vmem:[%s1 + $0x8] sm:$0xff]
  %s104 = sadd.s32 0, 16
  %s105 = scalar_lea.vmem %s1, %s104
  %v106 = vld [vmem:[%s105] sm:$0xff]
  %v107 = vld [vmem:[%s105 + $0x8] sm:$0xff]
  %s108 = sadd.s32 0, 32
  %s109 = scalar_lea.vmem %s1, %s108
  %v110 = vld [vmem:[%s109] sm:$0xff]
  %v111 = vld [vmem:[%s109 + $0x8] sm:$0xff]
  %s112 = sadd.s32 0, 48
  %s113 = scalar_lea.vmem %s1, %s112
  %v114 = vld [vmem:[%s113] sm:$0xff]
  %v115 = vld [vmem:[%s113 + $0x8] sm:$0xff]
  %s116 = sadd.s32 0, 64
  %s117 = scalar_lea.vmem %s1, %s116
  %v118 = vld [vmem:[%s117] sm:$0xff]
  %v119 = vld [vmem:[%s117 + $0x8] sm:$0xff]
  %s120 = sadd.s32 0, 80
  %s121 = scalar_lea.vmem %s1, %s120
  %v122 = vld [vmem:[%s121] sm:$0xff]
  %v123 = vld [vmem:[%s121 + $0x8] sm:$0xff]
  %s124 = sadd.s32 0, 96
  %s125 = scalar_lea.vmem %s1, %s124
  %v126 = vld [vmem:[%s125] sm:$0xff]
  %v127 = vld [vmem:[%s125 + $0x8] sm:$0xff]
  %s128 = sadd.s32 0, 112
  %s129 = scalar_lea.vmem %s1, %s128
  %v130 = vld [vmem:[%s129] sm:$0xff]
  %v131 = vld [vmem:[%s129 + $0x8] sm:$0xff]
  %v132 = vstv %s15
  %v133 = vmul.f32 %v102, %v132
  %v134 = vmul.f32 %v103, %v132
  %v135 = vstv %s16
  %v136 = vmul.f32 %v106, %v135
  %v137 = vmul.f32 %v107, %v135
  %v138 = vadd.f32 %v133, %v136
  %v139 = vadd.f32 %v134, %v137
  %v140 = vstv %s17
  %v141 = vmul.f32 %v110, %v140
  %v142 = vmul.f32 %v111, %v140
  %v143 = vadd.f32 %v138, %v141
  %v144 = vadd.f32 %v139, %v142
  %v145 = vstv %s18
  %v146 = vmul.f32 %v114, %v145
  %v147 = vmul.f32 %v115, %v145
  %v148 = vadd.f32 %v143, %v146
  %v149 = vadd.f32 %v144, %v147
  %v150 = vstv %s19
  %v151 = vmul.f32 %v118, %v150
  %v152 = vmul.f32 %v119, %v150
  %v153 = vadd.f32 %v148, %v151
  %v154 = vadd.f32 %v149, %v152
  %v155 = vstv %s20
  %v156 = vmul.f32 %v122, %v155
  %v157 = vmul.f32 %v123, %v155
  %v158 = vadd.f32 %v153, %v156
  %v159 = vadd.f32 %v154, %v157
  %v160 = vstv %s21
  %v161 = vmul.f32 %v126, %v160
  %v162 = vmul.f32 %v127, %v160
  %v163 = vadd.f32 %v158, %v161
  %v164 = vadd.f32 %v159, %v162
  %v165 = vstv %s22
  %v166 = vmul.f32 %v130, %v165
  %v167 = vmul.f32 %v131, %v165
  %v168 = vadd.f32 %v163, %v166
  %v169 = vadd.f32 %v164, %v167
  %v170 = vstv %s63
  %v171 = vadd.f32 %v168, %v170
  %v172 = vadd.f32 %v169, %v170
  %v173 = vsub.f32 0.0, %v171
  %v174 = vsub.f32 0.0, %v172
  %v175 = vmul.f32 %v173, 1.442695
  %v176 = vpow.pop %v175
  %v177 = vmul.f32 %v174, 1.442695
  %v178 = vpow.pop %v177
  %v179 = vadd.f32 %v176, 1.0
  %v180 = vadd.f32 %v178, 1.0
  %v181 = vrcp.pop %v179
  %v182 = vmul.f32 1.0, %v181
  %v183 = vrcp.pop %v180
  %v184 = vmul.f32 1.0, %v183
  %v185 = vstv %s23
  %v186 = vmul.f32 %v102, %v185
  %v187 = vmul.f32 %v103, %v185
  %v188 = vstv %s24
  %v189 = vmul.f32 %v106, %v188
  %v190 = vmul.f32 %v107, %v188
  %v191 = vadd.f32 %v186, %v189
  %v192 = vadd.f32 %v187, %v190
  %v193 = vstv %s25
  %v194 = vmul.f32 %v110, %v193
  %v195 = vmul.f32 %v111, %v193
  %v196 = vadd.f32 %v191, %v194
  %v197 = vadd.f32 %v192, %v195
  %v198 = vstv %s26
  %v199 = vmul.f32 %v114, %v198
  %v200 = vmul.f32 %v115, %v198
  %v201 = vadd.f32 %v196, %v199
  %v202 = vadd.f32 %v197, %v200
  %v203 = vstv %s27
  %v204 = vmul.f32 %v118, %v203
  %v205 = vmul.f32 %v119, %v203
  %v206 = vadd.f32 %v201, %v204
  %v207 = vadd.f32 %v202, %v205
  %v208 = vstv %s28
  %v209 = vmul.f32 %v122, %v208
  %v210 = vmul.f32 %v123, %v208
  %v211 = vadd.f32 %v206, %v209
  %v212 = vadd.f32 %v207, %v210
  %v213 = vstv %s29
  %v214 = vmul.f32 %v126, %v213
  %v215 = vmul.f32 %v127, %v213
  %v216 = vadd.f32 %v211, %v214
  %v217 = vadd.f32 %v212, %v215
  %v218 = vstv %s30
  %v219 = vmul.f32 %v130, %v218
  %v220 = vmul.f32 %v131, %v218
  %v221 = vadd.f32 %v216, %v219
  %v222 = vadd.f32 %v217, %v220
  %v223 = vstv %s64
  %v224 = vadd.f32 %v221, %v223
  %v225 = vadd.f32 %v222, %v223
  %v226 = vsub.f32 0.0, %v224
  %v227 = vsub.f32 0.0, %v225
  %v228 = vmul.f32 %v226, 1.442695
  %v229 = vpow.pop %v228
  %v230 = vmul.f32 %v227, 1.442695
  %v231 = vpow.pop %v230
  %v232 = vadd.f32 %v229, 1.0
  %v233 = vadd.f32 %v231, 1.0
  %v234 = vrcp.pop %v232
  %v235 = vmul.f32 1.0, %v234
  %v236 = vrcp.pop %v233
  %v237 = vmul.f32 1.0, %v236
  %v238 = vstv %s31
  %v239 = vmul.f32 %v102, %v238
  %v240 = vmul.f32 %v103, %v238
  %v241 = vstv %s32
  %v242 = vmul.f32 %v106, %v241
  %v243 = vmul.f32 %v107, %v241
  %v244 = vadd.f32 %v239, %v242
  %v245 = vadd.f32 %v240, %v243
  %v246 = vstv %s33
  %v247 = vmul.f32 %v110, %v246
  %v248 = vmul.f32 %v111, %v246
  %v249 = vadd.f32 %v244, %v247
  %v250 = vadd.f32 %v245, %v248
  %v251 = vstv %s34
  %v252 = vmul.f32 %v114, %v251
  %v253 = vmul.f32 %v115, %v251
  %v254 = vadd.f32 %v249, %v252
  %v255 = vadd.f32 %v250, %v253
  %v256 = vstv %s35
  %v257 = vmul.f32 %v118, %v256
  %v258 = vmul.f32 %v119, %v256
  %v259 = vadd.f32 %v254, %v257
  %v260 = vadd.f32 %v255, %v258
  %v261 = vstv %s36
  %v262 = vmul.f32 %v122, %v261
  %v263 = vmul.f32 %v123, %v261
  %v264 = vadd.f32 %v259, %v262
  %v265 = vadd.f32 %v260, %v263
  %v266 = vstv %s37
  %v267 = vmul.f32 %v126, %v266
  %v268 = vmul.f32 %v127, %v266
  %v269 = vadd.f32 %v264, %v267
  %v270 = vadd.f32 %v265, %v268
  %v271 = vstv %s38
  %v272 = vmul.f32 %v130, %v271
  %v273 = vmul.f32 %v131, %v271
  %v274 = vadd.f32 %v269, %v272
  %v275 = vadd.f32 %v270, %v273
  %v276 = vstv %s65
  %v277 = vadd.f32 %v274, %v276
  %v278 = vadd.f32 %v275, %v276
  %v279 = vsub.f32 0.0, %v277
  %v280 = vsub.f32 0.0, %v278
  %v281 = vmul.f32 %v279, 1.442695
  %v282 = vpow.pop %v281
  %v283 = vmul.f32 %v280, 1.442695
  %v284 = vpow.pop %v283
  %v285 = vadd.f32 %v282, 1.0
  %v286 = vadd.f32 %v284, 1.0
  %v287 = vrcp.pop %v285
  %v288 = vmul.f32 1.0, %v287
  %v289 = vrcp.pop %v286
  %v290 = vmul.f32 1.0, %v289
  %v291 = vstv %s39
  %v292 = vmul.f32 %v102, %v291
  %v293 = vmul.f32 %v103, %v291
  %v294 = vstv %s40
  %v295 = vmul.f32 %v106, %v294
  %v296 = vmul.f32 %v107, %v294
  %v297 = vadd.f32 %v292, %v295
  %v298 = vadd.f32 %v293, %v296
  %v299 = vstv %s41
  %v300 = vmul.f32 %v110, %v299
  %v301 = vmul.f32 %v111, %v299
  %v302 = vadd.f32 %v297, %v300
  %v303 = vadd.f32 %v298, %v301
  %v304 = vstv %s42
  %v305 = vmul.f32 %v114, %v304
  %v306 = vmul.f32 %v115, %v304
  %v307 = vadd.f32 %v302, %v305
  %v308 = vadd.f32 %v303, %v306
  %v309 = vstv %s43
  %v310 = vmul.f32 %v118, %v309
  %v311 = vmul.f32 %v119, %v309
  %v312 = vadd.f32 %v307, %v310
  %v313 = vadd.f32 %v308, %v311
  %v314 = vstv %s44
  %v315 = vmul.f32 %v122, %v314
  %v316 = vmul.f32 %v123, %v314
  %v317 = vadd.f32 %v312, %v315
  %v318 = vadd.f32 %v313, %v316
  %v319 = vstv %s45
  %v320 = vmul.f32 %v126, %v319
  %v321 = vmul.f32 %v127, %v319
  %v322 = vadd.f32 %v317, %v320
  %v323 = vadd.f32 %v318, %v321
  %v324 = vstv %s46
  %v325 = vmul.f32 %v130, %v324
  %v326 = vmul.f32 %v131, %v324
  %v327 = vadd.f32 %v322, %v325
  %v328 = vadd.f32 %v323, %v326
  %v329 = vstv %s66
  %v330 = vadd.f32 %v327, %v329
  %v331 = vadd.f32 %v328, %v329
  %v332 = vsub.f32 0.0, %v330
  %v333 = vsub.f32 0.0, %v331
  %v334 = vmul.f32 %v332, 1.442695
  %v335 = vpow.pop %v334
  %v336 = vmul.f32 %v333, 1.442695
  %v337 = vpow.pop %v336
  %v338 = vadd.f32 %v335, 1.0
  %v339 = vadd.f32 %v337, 1.0
  %v340 = vrcp.pop %v338
  %v341 = vmul.f32 1.0, %v340
  %v342 = vrcp.pop %v339
  %v343 = vmul.f32 1.0, %v342
  %v344 = vstv %s47
  %v345 = vmul.f32 %v102, %v344
  %v346 = vmul.f32 %v103, %v344
  %v347 = vstv %s48
  %v348 = vmul.f32 %v106, %v347
  %v349 = vmul.f32 %v107, %v347
  %v350 = vadd.f32 %v345, %v348
  %v351 = vadd.f32 %v346, %v349
  %v352 = vstv %s49
  %v353 = vmul.f32 %v110, %v352
  %v354 = vmul.f32 %v111, %v352
  %v355 = vadd.f32 %v350, %v353
  %v356 = vadd.f32 %v351, %v354
  %v357 = vstv %s50
  %v358 = vmul.f32 %v114, %v357
  %v359 = vmul.f32 %v115, %v357
  %v360 = vadd.f32 %v355, %v358
  %v361 = vadd.f32 %v356, %v359
  %v362 = vstv %s51
  %v363 = vmul.f32 %v118, %v362
  %v364 = vmul.f32 %v119, %v362
  %v365 = vadd.f32 %v360, %v363
  %v366 = vadd.f32 %v361, %v364
  %v367 = vstv %s52
  %v368 = vmul.f32 %v122, %v367
  %v369 = vmul.f32 %v123, %v367
  %v370 = vadd.f32 %v365, %v368
  %v371 = vadd.f32 %v366, %v369
  %v372 = vstv %s53
  %v373 = vmul.f32 %v126, %v372
  %v374 = vmul.f32 %v127, %v372
  %v375 = vadd.f32 %v370, %v373
  %v376 = vadd.f32 %v371, %v374
  %v377 = vstv %s54
  %v378 = vmul.f32 %v130, %v377
  %v379 = vmul.f32 %v131, %v377
  %v380 = vadd.f32 %v375, %v378
  %v381 = vadd.f32 %v376, %v379
  %v382 = vstv %s67
  %v383 = vadd.f32 %v380, %v382
  %v384 = vadd.f32 %v381, %v382
  %v385 = vsub.f32 0.0, %v383
  %v386 = vsub.f32 0.0, %v384
  %v387 = vmul.f32 %v385, 1.442695
  %v388 = vpow.pop %v387
  %v389 = vmul.f32 %v386, 1.442695
  %v390 = vpow.pop %v389
  %v391 = vadd.f32 %v388, 1.0
  %v392 = vadd.f32 %v390, 1.0
  %v393 = vrcp.pop %v391
  %v394 = vmul.f32 1.0, %v393
  %v395 = vrcp.pop %v392
  %v396 = vmul.f32 1.0, %v395
  %v397 = vstv %s55
  %v398 = vmul.f32 %v102, %v397
  %v399 = vmul.f32 %v103, %v397
  %v400 = vstv %s56
  %v401 = vmul.f32 %v106, %v400
  %v402 = vmul.f32 %v107, %v400
  %v403 = vadd.f32 %v398, %v401
  %v404 = vadd.f32 %v399, %v402
  %v405 = vstv %s57
  %v406 = vmul.f32 %v110, %v405
  %v407 = vmul.f32 %v111, %v405
  %v408 = vadd.f32 %v403, %v406
  %v409 = vadd.f32 %v404, %v407
  %v410 = vstv %s58
  %v411 = vmul.f32 %v114, %v410
  %v412 = vmul.f32 %v115, %v410
  %v413 = vadd.f32 %v408, %v411
  %v414 = vadd.f32 %v409, %v412
  %v415 = vstv %s59
  %v416 = vmul.f32 %v118, %v415
  %v417 = vmul.f32 %v119, %v415
  %v418 = vadd.f32 %v413, %v416
  %v419 = vadd.f32 %v414, %v417
  %v420 = vstv %s60
  %v421 = vmul.f32 %v122, %v420
  %v422 = vmul.f32 %v123, %v420
  %v423 = vadd.f32 %v418, %v421
  %v424 = vadd.f32 %v419, %v422
  %v425 = vstv %s61
  %v426 = vmul.f32 %v126, %v425
  %v427 = vmul.f32 %v127, %v425
  %v428 = vadd.f32 %v423, %v426
  %v429 = vadd.f32 %v424, %v427
  %v430 = vstv %s62
  %v431 = vmul.f32 %v130, %v430
  %v432 = vmul.f32 %v131, %v430
  %v433 = vadd.f32 %v428, %v431
  %v434 = vadd.f32 %v429, %v432
  %v435 = vstv %s68
  %v436 = vadd.f32 %v433, %v435
  %v437 = vadd.f32 %v434, %v435
  %v438 = vsub.f32 0.0, %v436
  %v439 = vsub.f32 0.0, %v437
  %v440 = vmul.f32 %v438, 1.442695
  %v441 = vpow.pop %v440
  %v442 = vmul.f32 %v439, 1.442695
  %v443 = vpow.pop %v442
  %v444 = vadd.f32 %v441, 1.0
  %v445 = vadd.f32 %v443, 1.0
  %v446 = vrcp.pop %v444
  %v447 = vmul.f32 1.0, %v446
  %v448 = vrcp.pop %v445
  %v449 = vmul.f32 1.0, %v448
  %v450 = vstv %s69
  %v451 = vmul.f32 %v182, %v450
  %v452 = vmul.f32 %v184, %v450
  %v453 = vstv %s70
  %v454 = vmul.f32 %v235, %v453
  %v455 = vmul.f32 %v237, %v453
  %v456 = vadd.f32 %v451, %v454
  %v457 = vadd.f32 %v452, %v455
  %v458 = vstv %s71
  %v459 = vmul.f32 %v288, %v458
  %v460 = vmul.f32 %v290, %v458
  %v461 = vadd.f32 %v456, %v459
  %v462 = vadd.f32 %v457, %v460
  %v463 = vstv %s72
  %v464 = vmul.f32 %v341, %v463
  %v465 = vmul.f32 %v343, %v463
  %v466 = vadd.f32 %v461, %v464
  %v467 = vadd.f32 %v462, %v465
  %v468 = vstv %s73
  %v469 = vmul.f32 %v394, %v468
  %v470 = vmul.f32 %v396, %v468
  %v471 = vadd.f32 %v466, %v469
  %v472 = vadd.f32 %v467, %v470
  %v473 = vstv %s74
  %v474 = vmul.f32 %v447, %v473
  %v475 = vmul.f32 %v449, %v473
  %v476 = vadd.f32 %v471, %v474
  %v477 = vadd.f32 %v472, %v475
  %v478 = vstv %s93
  %v479 = vadd.f32 %v476, %v478
  %v480 = vadd.f32 %v477, %v478
  %v481 = vsub.f32 0.0, %v479
  %v482 = vsub.f32 0.0, %v480
  %v483 = vmul.f32 %v481, 1.442695
  %v484 = vpow.pop %v483
  %v485 = vmul.f32 %v482, 1.442695
  %v486 = vpow.pop %v485
  %v487 = vadd.f32 %v484, 1.0
  %v488 = vadd.f32 %v486, 1.0
  %v489 = vrcp.pop %v487
  %v490 = vmul.f32 1.0, %v489
  %v491 = vrcp.pop %v488
  %v492 = vmul.f32 1.0, %v491
  %v493 = vstv %s75
  %v494 = vmul.f32 %v182, %v493
  %v495 = vmul.f32 %v184, %v493
  %v496 = vstv %s76
  %v497 = vmul.f32 %v235, %v496
  %v498 = vmul.f32 %v237, %v496
  %v499 = vadd.f32 %v494, %v497
  %v500 = vadd.f32 %v495, %v498
  %v501 = vstv %s77
  %v502 = vmul.f32 %v288, %v501
  %v503 = vmul.f32 %v290, %v501
  %v504 = vadd.f32 %v499, %v502
  %v505 = vadd.f32 %v500, %v503
  %v506 = vstv %s78
  %v507 = vmul.f32 %v341, %v506
  %v508 = vmul.f32 %v343, %v506
  %v509 = vadd.f32 %v504, %v507
  %v510 = vadd.f32 %v505, %v508
  %v511 = vstv %s79
  %v512 = vmul.f32 %v394, %v511
  %v513 = vmul.f32 %v396, %v511
  %v514 = vadd.f32 %v509, %v512
  %v515 = vadd.f32 %v510, %v513
  %v516 = vstv %s80
  %v517 = vmul.f32 %v447, %v516
  %v518 = vmul.f32 %v449, %v516
  %v519 = vadd.f32 %v514, %v517
  %v520 = vadd.f32 %v515, %v518
  %v521 = vstv %s94
  %v522 = vadd.f32 %v519, %v521
  %v523 = vadd.f32 %v520, %v521
  %v524 = vsub.f32 0.0, %v522
  %v525 = vsub.f32 0.0, %v523
  %v526 = vmul.f32 %v524, 1.442695
  %v527 = vpow.pop %v526
  %v528 = vmul.f32 %v525, 1.442695
  %v529 = vpow.pop %v528
  %v530 = vadd.f32 %v527, 1.0
  %v531 = vadd.f32 %v529, 1.0
  %v532 = vrcp.pop %v530
  %v533 = vmul.f32 1.0, %v532
  %v534 = vrcp.pop %v531
  %v535 = vmul.f32 1.0, %v534
  %v536 = vstv %s81
  %v537 = vmul.f32 %v182, %v536
  %v538 = vmul.f32 %v184, %v536
  %v539 = vstv %s82
  %v540 = vmul.f32 %v235, %v539
  %v541 = vmul.f32 %v237, %v539
  %v542 = vadd.f32 %v537, %v540
  %v543 = vadd.f32 %v538, %v541
  %v544 = vstv %s83
  %v545 = vmul.f32 %v288, %v544
  %v546 = vmul.f32 %v290, %v544
  %v547 = vadd.f32 %v542, %v545
  %v548 = vadd.f32 %v543, %v546
  %v549 = vstv %s84
  %v550 = vmul.f32 %v341, %v549
  %v551 = vmul.f32 %v343, %v549
  %v552 = vadd.f32 %v547, %v550
  %v553 = vadd.f32 %v548, %v551
  %v554 = vstv %s85
  %v555 = vmul.f32 %v394, %v554
  %v556 = vmul.f32 %v396, %v554
  %v557 = vadd.f32 %v552, %v555
  %v558 = vadd.f32 %v553, %v556
  %v559 = vstv %s86
  %v560 = vmul.f32 %v447, %v559
  %v561 = vmul.f32 %v449, %v559
  %v562 = vadd.f32 %v557, %v560
  %v563 = vadd.f32 %v558, %v561
  %v564 = vstv %s95
  %v565 = vadd.f32 %v562, %v564
  %v566 = vadd.f32 %v563, %v564
  %v567 = vsub.f32 0.0, %v565
  %v568 = vsub.f32 0.0, %v566
  %v569 = vmul.f32 %v567, 1.442695
  %v570 = vpow.pop %v569
  %v571 = vmul.f32 %v568, 1.442695
  %v572 = vpow.pop %v571
  %v573 = vadd.f32 %v570, 1.0
  %v574 = vadd.f32 %v572, 1.0
  %v575 = vrcp.pop %v573
  %v576 = vmul.f32 1.0, %v575
  %v577 = vrcp.pop %v574
  %v578 = vmul.f32 1.0, %v577
  %v579 = vstv %s87
  %v580 = vmul.f32 %v182, %v579
  %v581 = vmul.f32 %v184, %v579
  %v582 = vstv %s88
  %v583 = vmul.f32 %v235, %v582
  %v584 = vmul.f32 %v237, %v582
  %v585 = vadd.f32 %v580, %v583
  %v586 = vadd.f32 %v581, %v584
  %v587 = vstv %s89
  %v588 = vmul.f32 %v288, %v587
  %v589 = vmul.f32 %v290, %v587
  %v590 = vadd.f32 %v585, %v588
  %v591 = vadd.f32 %v586, %v589
  %v592 = vstv %s90
  %v593 = vmul.f32 %v341, %v592
  %v594 = vmul.f32 %v343, %v592
  %v595 = vadd.f32 %v590, %v593
  %v596 = vadd.f32 %v591, %v594
  %v597 = vstv %s91
  %v598 = vmul.f32 %v394, %v597
  %v599 = vmul.f32 %v396, %v597
  %v600 = vadd.f32 %v595, %v598
  %v601 = vadd.f32 %v596, %v599
  %v602 = vstv %s92
  %v603 = vmul.f32 %v447, %v602
  %v604 = vmul.f32 %v449, %v602
  %v605 = vadd.f32 %v600, %v603
  %v606 = vadd.f32 %v601, %v604
  %v607 = vstv %s96
  %v608 = vadd.f32 %v605, %v607
  %v609 = vadd.f32 %v606, %v607
  %v610 = vsub.f32 0.0, %v608
  %v611 = vsub.f32 0.0, %v609
  %v612 = vmul.f32 %v610, 1.442695
  %v613 = vpow.pop %v612
  %v614 = vmul.f32 %v611, 1.442695
  %v615 = vpow.pop %v614
  %v616 = vadd.f32 %v613, 1.0
  %v617 = vadd.f32 %v615, 1.0
  %v618 = vrcp.pop %v616
  %v619 = vmul.f32 1.0, %v618
  %v620 = vrcp.pop %v617
  %v621 = vmul.f32 1.0, %v620
  %v622 = vstv %s97
  %v623 = vmul.f32 %v490, %v622
  %v624 = vmul.f32 %v492, %v622
  %v625 = vstv %s98
  %v626 = vmul.f32 %v533, %v625
  %v627 = vmul.f32 %v535, %v625
  %v628 = vadd.f32 %v623, %v626
  %v629 = vadd.f32 %v624, %v627
  %v630 = vstv %s99
  %v631 = vmul.f32 %v576, %v630
  %v632 = vmul.f32 %v578, %v630
  %v633 = vadd.f32 %v628, %v631
  %v634 = vadd.f32 %v629, %v632
  %v635 = vstv %s100
  %v636 = vmul.f32 %v619, %v635
  %v637 = vmul.f32 %v621, %v635
  %v638 = vadd.f32 %v633, %v636
  %v639 = vadd.f32 %v634, %v637
  %v640 = vstv %s101
  %v641 = vadd.f32 %v638, %v640
  %v642 = vadd.f32 %v639, %v640
  %v643 = vsub.f32 0.0, %v641
  %v644 = vsub.f32 0.0, %v642
  %v645 = vmul.f32 %v643, 1.442695
  %v646 = vpow.pop %v645
  %v647 = vmul.f32 %v644, 1.442695
  %v648 = vpow.pop %v647
  %v649 = vadd.f32 %v646, 1.0
  %v650 = vadd.f32 %v648, 1.0
  %v651 = vrcp.pop %v649
  %v652 = vmul.f32 1.0, %v651
  %v653 = vrcp.pop %v650
  %v654 = vmul.f32 1.0, %v653
  %655 = vst [vmem:[%s2] sm:$0xff] %v652
  %656 = vst [vmem:[%s2 + $0x8] sm:$0xff] %v654
  // Predicated region
  $region6: #{mlp_forward.1} parent=0 // pred_check
    _
  $region7: #{mlp_forward.1} parent=0 // pred_check_branch
    %658 = sbr.rel (0) target = $region9
  $region8: #{mlp_forward.1} parent=0 // pred_region
    _
  $region9: #{mlp_forward.1} parent=0 // pred_fallthru
    _
  // Predicated region
  $region10: #{mlp_forward.1} parent=0 // pred_check
    _
  $region11: #{mlp_forward.1} parent=0 // pred_check_branch
    %660 = sbr.rel (0) target = $region13
  $region12: #{mlp_forward.1} parent=0 // pred_region
    _
  $region13: #{mlp_forward.1} parent=0 // pred_fallthru
    _

</llo_original>
